<compile_context>
chip_gen: v7x
topology: tpu7x:2x2x1
jax: 0.10.0
libtpu: 0.0.40
codegen_flags: <defaults>
</compile_context>

<pallas_src>
import numpy as np
import jax
import jax.numpy as jnp
from jax.experimental import pallas as pl
from jax.experimental.pallas import tpu as pltpu


# ----------------------------- activations ---------------------------------

def _apply_act(h, name):
    """Elementwise activations matching get_activation(); h is f32."""
    if name is None or name == "linear":
        return h
    if name == "relu":
        return jnp.maximum(h, 0.0)
    if name == "sigmoid":
        return jax.nn.sigmoid(h)
    if name == "softplus":
        return jax.nn.softplus(h)
    if name == "tanh":
        return jnp.tanh(h)
    if name == "leakyrelu":
        return jnp.where(h >= 0.0, h, 0.2 * h)
    if name == "selu":
        return jax.nn.selu(h)
    if name == "elu":
        return jax.nn.elu(h)
    if name == "softmax":
        # Only valid when the output axis is a single full-width tile; the tile
        # chooser forces tn == D for softmax so the full row is in VMEM.
        # TODO(synk): a D-tiled softmax would need a cross-tile max/sum pass.
        return jax.nn.softmax(h, axis=1)
    raise ValueError(f"Unexpected activation: {name}")


# ----------------------------- Pallas kernel -------------------------------

def _make_fc_kernel(acts, n_layers):
    """Fused MLP kernel: refs = (x, w0, b0, ..., w_{L-1}, b_{L-1}, out).

    Hidden layers are full-array resident (they are tiny); only the LAST
    layer's weight/bias/output (and the input batch) are tiled by the grid.
    Hidden activations are recomputed per tile so grid points stay independent.
    """

    def kernel(*refs):
        x_ref = refs[0]
        out_ref = refs[-1]
        h = x_ref[...].astype(jnp.float32)
        for i in range(n_layers):
            w_ref = refs[1 + 2 * i]
            b_ref = refs[2 + 2 * i]
            # bf16 x bf16 on the MXU, f32 accumulation, f32 bias add.
            h = jnp.dot(h.astype(w_ref.dtype), w_ref[...],
                        preferred_element_type=jnp.float32)
            h = h + b_ref[...]
            h = _apply_act(h, acts[i])
        out_ref[...] = h.astype(out_ref.dtype)

    return kernel


# ----------------------------- tiling helpers -------------------------------

_VMEM_LIMIT_BYTES = 32 * 1024 * 1024     # scoped limit: safe on v5e/v6e (128 MiB) and v7x (64 MiB)
_TILE_BUDGET_BYTES = 24 * 1024 * 1024    # leave headroom under the scoped limit


def _vmem_estimate(tb, tn, in_chan, hidden_params, k_last, hidden_widths):
    """Conservative VMEM use: all BlockSpec operands double-buffered + f32 temps."""
    total = 2 * tb * in_chan * 4                       # input tile (f32)
    for (w, b) in hidden_params:                       # resident hidden layers
        total += 2 * (w.size * 2 + b.size * 4)
    total += 2 * k_last * tn * 2                       # last weight tile (bf16)
    total += 2 * tn * 4                                # last bias tile (f32)
    total += 2 * tb * tn * 4                           # output tile (f32)
    widest = max(hidden_widths + [tn, in_chan])
    total += 4 * tb * widest * 4                       # in-kernel f32 temporaries
    return total


def _choose_tiles(B, D, in_chan, hidden_params, k_last, hidden_widths, force_full_d):
    """Pick (tb, tn): batch tile and lane-dense last-layer output-column tile."""

    def fits(tb, tn):
        return _vmem_estimate(tb, tn, in_chan, hidden_params,
                              k_last, hidden_widths) <= _TILE_BUDGET_BYTES

    if force_full_d:
        tn_cands = [D]
    else:
        tn_cands = [c for c in (4096, 2048, 1024, 512, 256, 128) if D % c == 0]
        if D not in tn_cands:
            tn_cands.append(D)          # fallback: single full-width block
    min_tn = min(tn_cands)

    # Batch tile: prefer a single block; shrink (multiples of 8) only if needed.
    tb = B
    if not fits(B, min_tn):
        for c in (512, 256, 128, 64, 32, 16, 8):
            if c < B and B % c == 0 and fits(c, min_tn):
                tb = c
                break

    # Output-column tile: largest that fits with the chosen batch tile.
    tn = next((c for c in tn_cands if fits(tb, c)), min_tn)
    return tb, tn


# ----------------------------- module wrapper -------------------------------

class FCImagePallas:
    """Pallas port of FC_image (MLP + reshape glue)."""

    def __init__(self, in_chan=784, out_chan=2, l_hidden=None, activation=None,
                 out_activation="linear", out_chan_num=1, seed=0):
        l_hidden = list(l_hidden) if l_hidden else []
        activation = list(activation) if activation else []
        assert len(l_hidden) == len(activation)

        self.in_chan = int(in_chan)
        self.out_chan = int(out_chan)
        self.out_chan_num = int(out_chan_num)

        l_neurons = l_hidden + [self.out_chan]
        self.acts = activation + [out_activation]

        # Deterministic init; weights stored in bf16 (HBM-traffic win), biases f32.
        key = jax.random.PRNGKey(seed)
        params = []
        prev = self.in_chan
        for n in l_neurons:
            key, kw = jax.random.split(key)
            w = (jax.random.normal(kw, (prev, n), jnp.float32)
                 / np.sqrt(prev)).astype(jnp.bfloat16)
            b = jnp.zeros((1, n), jnp.float32)
            params.append((w, b))
            prev = n
        self.params = params
        self._fns = {}  # cache of pallas_call callables keyed by batch size

    # ---------------- kernel builder ----------------

    def _build(self, B):
        L = len(self.params)
        D = self.out_chan
        k_last = self.params[-1][0].shape[0]
        hidden_params = self.params[:-1]
        hidden_widths = [w.shape[1] for (w, _) in hidden_params]

        tb, tn = _choose_tiles(B, D, self.in_chan, hidden_params, k_last,
                               hidden_widths,
                               force_full_d=(self.acts[-1] == "softmax"))
        n_b = B // tb if B % tb == 0 else 1
        if B % tb != 0:
            tb, n_b = B, 1
        n_d = D // tn if D % tn == 0 else 1
        if D % tn != 0:
            tn, n_d = D, 1

        kernel = _make_fc_kernel(self.acts, L)

        # Grid: D tiles OUTER (axis 0), batch tiles INNER (axis 1).  The dominant
        # last-layer weight tile only depends on the outer index, so it is NOT
        # re-fetched across the inner batch sweep.
        in_specs = [pl.BlockSpec((tb, self.in_chan), lambda j, i: (i, 0))]
        for idx, (w, b) in enumerate(self.params):
            if idx < L - 1:
                in_specs.append(pl.BlockSpec(w.shape, lambda j, i: (0, 0)))
                in_specs.append(pl.BlockSpec(b.shape, lambda j, i: (0, 0)))
            else:
                in_specs.append(pl.BlockSpec((w.shape[0], tn), lambda j, i: (0, j)))
                in_specs.append(pl.BlockSpec((1, tn), lambda j, i: (0, j)))
        out_spec = pl.BlockSpec((tb, tn), lambda j, i: (i, j))

        return pl.pallas_call(
            kernel,
            out_shape=jax.ShapeDtypeStruct((B, D), jnp.float32),
            grid_spec=pltpu.PrefetchScalarGridSpec(
                num_scalar_prefetch=0,
                grid=(n_d, n_b),
                in_specs=in_specs,
                out_specs=out_spec,
            ),
            compiler_params=pltpu.CompilerParams(
                # Every (D-tile, batch-tile) pair is independent -> shard across
                # v7x's 2 TensorCores; harmless on single-TC v5e/v6e.
                dimension_semantics=("parallel", "parallel"),
                vmem_limit_bytes=_VMEM_LIMIT_BYTES,
            ),
        )

    def _run_flat(self, x2d):
        B = x2d.shape[0]
        if B not in self._fns:
            self._fns[B] = self._build(B)
        flat_params = []
        for (w, b) in self.params:
            flat_params.extend([w, b])
        return self._fns[B](x2d.astype(jnp.float32), *flat_params)

    # ---------------- forward (matches FC_image.forward) ----------------

    def forward(self, x):
        if x.ndim == 4:
            x2d = x.reshape(-1, self.in_chan)          # .view(-1, in_chan)
            return self._run_flat(x2d)                 # flat (N, out_chan)
        else:
            out = self._run_flat(x)
            dim = int(np.sqrt(self.out_chan / self.out_chan_num))
            return out.reshape(-1, self.out_chan_num, dim, dim)

    # ---------------- pure-JAX reference (same dtypes/math) ----------------

    def _ref_flat(self, x2d):
        h = x2d.astype(jnp.float32)
        for (w, b), act in zip(self.params, self.acts):
            h = jnp.dot(h.astype(w.dtype), w,
                        preferred_element_type=jnp.float32) + b
            h = _apply_act(h, act)
        return h

    def ref_forward(self, x):
        if x.ndim == 4:
            return self._ref_flat(x.reshape(-1, self.in_chan))
        out = self._ref_flat(x)
        dim = int(np.sqrt(self.out_chan / self.out_chan_num))
        return out.reshape(-1, self.out_chan_num, dim, dim)


# ----------------------------- main ------------------------------------------

if __name__ == "__main__":
    key = jax.random.PRNGKey(0)
    kz, kx, kz2 = jax.random.split(key, 3)

    B, Z, HID = 2, 8, 32
    C, dim = 4, 16
    D = C * dim * dim  # 1024

    # --- 2-D input branch: latent -> image (out reshaped to NCHW) ------------
    dec = FCImagePallas(in_chan=Z, out_chan=D, l_hidden=[HID],
                        activation=["relu"], out_activation="linear",
                        out_chan_num=C, seed=0)
    z = jax.random.normal(kz, (B, Z), jnp.float32)
    y = dec.forward(z)
    jax.block_until_ready(y)
    assert y.shape == (B, C, dim, dim)
    np.testing.assert_allclose(np.asarray(y), np.asarray(dec.ref_forward(z)),
                               rtol=1e-3, atol=1e-3)

    # --- 4-D input branch: image flattened to in_chan, flat output -----------
    enc = FCImagePallas(in_chan=D, out_chan=8, l_hidden=[HID],
                        activation=["relu"], out_activation="linear",
                        out_chan_num=1, seed=1)
    x = jax.random.normal(kx, (B, C, dim, dim), jnp.float32)
    e = enc.forward(x)
    jax.block_until_ready(e)
    assert e.shape == (B, 8)
    np.testing.assert_allclose(np.asarray(e), np.asarray(enc.ref_forward(x)),
                               rtol=1e-3, atol=1e-3)

    # --- deeper MLP, larger batch, non-trivial output activation -------------
    dec2 = FCImagePallas(in_chan=Z, out_chan=D, l_hidden=[HID, HID],
                         activation=["relu", "tanh"], out_activation="sigmoid",
                         out_chan_num=C, seed=2)
    z2 = jax.random.normal(kz2, (16, Z), jnp.float32)
    y2 = dec2.forward(z2)
    jax.block_until_ready(y2)
    assert y2.shape == (16, C, dim, dim)
    np.testing.assert_allclose(np.asarray(y2), np.asarray(dec2.ref_forward(z2)),
                               rtol=1e-3, atol=1e-3)

    print("KERNEL_OK")
</pallas_src>

<mosaic_0001>
module attributes {stable_mosaic.version = 11 : i64} {
  func.func @kernel(%arg0: i32, %arg1: i32, %arg2: memref<2x8xf32, #tpu.memory_space<vmem>>, %arg3: memref<8x32xbf16, #tpu.memory_space<vmem>>, %arg4: memref<1x32xf32, #tpu.memory_space<vmem>>, %arg5: memref<32x1024xbf16, #tpu.memory_space<vmem>>, %arg6: memref<1x1024xf32, #tpu.memory_space<vmem>>, %arg7: memref<2x1024xf32, #tpu.memory_space<vmem>>) attributes {dimension_semantics = [#tpu.dimension_semantics<parallel>, #tpu.dimension_semantics<parallel>], iteration_bounds = array<i64: 1, 1>, scalar_prefetch = 0 : i64, scratch_operands = 0 : i64, tpu.core_type = #tpu.core_type<tc>, window_params = [{transform_indices = @transform_0, window_bounds = array<i64: 2, 8>}, {pipeline_mode = #tpu.pipeline_mode<synchronous>, transform_indices = @transform_1, window_bounds = array<i64: 8, 32>}, {pipeline_mode = #tpu.pipeline_mode<synchronous>, transform_indices = @transform_2, window_bounds = array<i64: 1, 32>}, {transform_indices = @transform_3, window_bounds = array<i64: 32, 1024>}, {transform_indices = @transform_4, window_bounds = array<i64: 1, 1024>}, {transform_indices = @transform_5, window_bounds = array<i64: 2, 1024>}]} {
    %c0 = arith.constant 0 : index
    %c0_0 = arith.constant 0 : index
    %0 = vector.load %arg2[%c0, %c0_0] : memref<2x8xf32, #tpu.memory_space<vmem>>, vector<2x8xf32>
    %1 = arith.truncf %0 : vector<2x8xf32> to vector<2x8xbf16>
    %c0_1 = arith.constant 0 : index
    %c0_2 = arith.constant 0 : index
    %2 = vector.load %arg3[%c0_1, %c0_2] : memref<8x32xbf16, #tpu.memory_space<vmem>>, vector<8x32xbf16>
    %cst = arith.constant dense<0.000000e+00> : vector<2x32xf32>
    %3 = tpu.matmul %1, %2, %cst {dimension_numbers = #tpu.dot_dimension_numbers<[1], [0], [0], [1], [0, 0, 1, 1], [], []>} : vector<2x8xbf16>, vector<8x32xbf16>, vector<2x32xf32> -> vector<2x32xf32>
    %c0_3 = arith.constant 0 : index
    %c0_4 = arith.constant 0 : index
    %4 = vector.load %arg4[%c0_3, %c0_4] : memref<1x32xf32, #tpu.memory_space<vmem>>, vector<1x32xf32>
    %5 = vector.broadcast %4 : vector<1x32xf32> to vector<2x32xf32>
    %6 = arith.addf %3, %5 : vector<2x32xf32>
    %cst_5 = arith.constant 0.000000e+00 : f32
    %7 = vector.broadcast %cst_5 : f32 to vector<2x32xf32>
    %8 = arith.maximumf %6, %7 : vector<2x32xf32>
    %9 = arith.truncf %8 : vector<2x32xf32> to vector<2x32xbf16>
    %c0_6 = arith.constant 0 : index
    %c0_7 = arith.constant 0 : index
    %10 = vector.load %arg5[%c0_6, %c0_7] : memref<32x1024xbf16, #tpu.memory_space<vmem>>, vector<32x1024xbf16>
    %cst_8 = arith.constant dense<0.000000e+00> : vector<2x1024xf32>
    %11 = tpu.matmul %9, %10, %cst_8 {dimension_numbers = #tpu.dot_dimension_numbers<[1], [0], [0], [1], [0, 0, 1, 1], [], []>} : vector<2x32xbf16>, vector<32x1024xbf16>, vector<2x1024xf32> -> vector<2x1024xf32>
    %c0_9 = arith.constant 0 : index
    %c0_10 = arith.constant 0 : index
    %12 = vector.load %arg6[%c0_9, %c0_10] : memref<1x1024xf32, #tpu.memory_space<vmem>>, vector<1x1024xf32>
    %13 = vector.broadcast %12 : vector<1x1024xf32> to vector<2x1024xf32>
    %14 = arith.addf %11, %13 : vector<2x1024xf32>
    %c0_11 = arith.constant 0 : index
    %c0_12 = arith.constant 0 : index
    %15 = vector.load %arg7[%c0_11, %c0_12] : memref<2x1024xf32, #tpu.memory_space<vmem>>, vector<2x1024xf32>
    tpu.vector_store %arg7[%c0_11, %c0_12], %14 {strides = array<i32>} : memref<2x1024xf32, #tpu.memory_space<vmem>>, vector<2x1024xf32>,
    return
  }
  func.func @transform_0(%arg0: i32, %arg1: i32) -> (i32, i32) {
    %c0_i32 = arith.constant 0 : i32
    %c0_i32_0 = arith.constant 0 : i32
    return %arg1, %c0_i32 : i32, i32
  }
  func.func @transform_1(%arg0: i32, %arg1: i32) -> (i32, i32) {
    %c0_i32 = arith.constant 0 : i32
    %c0_i32_0 = arith.constant 0 : i32
    %c0_i32_1 = arith.constant 0 : i32
    return %c0_i32, %c0_i32_0 : i32, i32
  }
  func.func @transform_2(%arg0: i32, %arg1: i32) -> (i32, i32) {
    %c0_i32 = arith.constant 0 : i32
    %c0_i32_0 = arith.constant 0 : i32
    %c0_i32_1 = arith.constant 0 : i32
    return %c0_i32, %c0_i32_0 : i32, i32
  }
  func.func @transform_3(%arg0: i32, %arg1: i32) -> (i32, i32) {
    %c0_i32 = arith.constant 0 : i32
    %c0_i32_0 = arith.constant 0 : i32
    return %c0_i32, %arg0 : i32, i32
  }
  func.func @transform_4(%arg0: i32, %arg1: i32) -> (i32, i32) {
    %c0_i32 = arith.constant 0 : i32
    %c0_i32_0 = arith.constant 0 : i32
    return %c0_i32, %arg0 : i32, i32
  }
  func.func @transform_5(%arg0: i32, %arg1: i32) -> (i32, i32) {
    %c0_i32 = arith.constant 0 : i32
    return %arg1, %arg0 : i32, i32
  }
}

</mosaic_0001>

<llo_original>
// kernel: tpu_custom_call.1
$region0: #{tpu_custom_call.1}
  #allocation0 [shape = 'u32[]', space=smem, size = 0x4, offset = 0x4, fixed_abs, tag = 'smem constant byte address 0x4 - core index']
  #allocation1 [shape = 'u32[144,128]{1,0:T(1,128)}', space=vmem, size = 0x12000, scoped, tag = 'internal scratch']
  %s0 = inlined_call_operand.hbm [shape: f32[2,8], index: 0, kind: input, shape index: {}]
  %s1 = inlined_call_operand.hbm [shape: bf16[8,32], index: 1, kind: input, shape index: {}]
  %s2 = inlined_call_operand.vmem [shape: f32[1,32], index: 2, kind: input, shape index: {}]
  %s3 = inlined_call_operand.hbm [shape: bf16[32,1024], index: 3, kind: input, shape index: {}]
  %s4 = inlined_call_operand.vmem [shape: f32[1,1024], index: 4, kind: input, shape index: {}]
  %s5 = inlined_call_operand.hbm [shape: f32[2,1024], index: 5, kind: output, shape index: {}]
  %s6 = sld [smem:[#allocation0]]
  $region42: #{tpu_custom_call.1} parent=0
    _
  %s8 = ssub.s32 1, %s6
  %s9 = scalar_select 0, %s8, %s6
  $region1: #{tpu_custom_call.1} parent=0
    #allocation2 [shape = 'u8[1024]{0}', space=vmem, size = 0x400, scoped, tag = 'input window, operand 0, single buffered']
    #allocation3 [shape = 's32[1]{0}', space=sflag, size = 0x4, scoped, tag = 'scoped memory for tpu_custom_call.1']
    #allocation4 [shape = 's32[1]{0}', space=sflag, size = 0x4, scoped, tag = 'scoped memory for tpu_custom_call.1']
    #allocation5 [shape = 'u8[2048]{0}', space=vmem, size = 0x800, scoped, tag = 'input window, operand 1, single buffered']
    #allocation6 [shape = 's32[1]{0}', space=sflag, size = 0x4, scoped, tag = 'scoped memory for tpu_custom_call.1']
    #allocation7 [shape = 'u8[65536]{0}', space=vmem, size = 0x10000, scoped, tag = 'input window, operand 3, single buffered']
    #allocation8 [shape = 'u8[8192]{0}', space=vmem, size = 0x2000, scoped, tag = 'output window, operand 0, single buffered']
    %10 = vsyncpa [#allocation3], 0
    %11 = vsyncpa [#allocation6], 0
    %12 = vsyncpa [#allocation4], 0
    // Predicated region
    $region2: #{tpu_custom_call.1} parent=1 // pred_check
      _
    $region3: #{tpu_custom_call.1} parent=1 // pred_check_branch
      %14 = sbr.rel (0) target = $region5
    $region4: #{tpu_custom_call.1} parent=1 // pred_region
      %s16 = ssub.s32 32, 32
      %17 = vsyncadd [#allocation3], %s16
      %s19 = sshll.u32 [#allocation2], 4
      %s20 = int_to_ptr.vmem [resolvable:$true] %s19
      %22 = dma.hbm_to_vmem [thread:$0]  %s0, 32, %s20, [#allocation3]
    $region5: #{tpu_custom_call.1} parent=1 // pred_fallthru
      _
    // Predicated region
    $region6: #{tpu_custom_call.1} parent=1 // pred_check
      _
    $region7: #{tpu_custom_call.1} parent=1 // pred_check_branch
      %24 = sbr.rel (0) target = $region9
    $region8: #{tpu_custom_call.1} parent=1 // pred_region
      %s26 = ssub.s32 64, 64
      %27 = vsyncadd [#allocation6], %s26
      %s29 = sshll.u32 [#allocation5], 4
      %s30 = int_to_ptr.vmem [resolvable:$true] %s29
      %32 = dma.hbm_to_vmem [thread:$0]  %s1, 64, %s30, [#allocation6]
    $region9: #{tpu_custom_call.1} parent=1 // pred_fallthru
      _
    // Predicated region
    $region10: #{tpu_custom_call.1} parent=1 // pred_check
      _
    $region11: #{tpu_custom_call.1} parent=1 // pred_check_branch
      %34 = sbr.rel (0) target = $region13
    $region12: #{tpu_custom_call.1} parent=1 // pred_region
      _
    $region13: #{tpu_custom_call.1} parent=1 // pred_fallthru
      _
    // Predicated region
    $region14: #{tpu_custom_call.1} parent=1 // pred_check
      _
    $region15: #{tpu_custom_call.1} parent=1 // pred_check_branch
      %36 = sbr.rel (0) target = $region17
    $region16: #{tpu_custom_call.1} parent=1 // pred_region
      %s38 = ssub.s32 2048, 2048
      %39 = vsyncadd [#allocation6], %s38
      %s40 = sshll.u32 [#allocation7], 4
      %s41 = int_to_ptr.vmem [resolvable:$true] %s40
      %46 = dma.hbm_to_vmem [thread:$0]  %s3, 2048, %s41, [#allocation6], 512, 512, 32
    $region17: #{tpu_custom_call.1} parent=1 // pred_fallthru
      _
    // Predicated region
    $region18: #{tpu_custom_call.1} parent=1 // pred_check
      _
    $region19: #{tpu_custom_call.1} parent=1 // pred_check_branch
      %48 = sbr.rel (0) target = $region21
    $region20: #{tpu_custom_call.1} parent=1 // pred_region
      _
    $region21: #{tpu_custom_call.1} parent=1 // pred_fallthru
      _
    // Predicated region
    $region22: #{tpu_custom_call.1} parent=1 // pred_check
      _
    $region23: #{tpu_custom_call.1} parent=1 // pred_check_branch
      %50 = sbr.rel (0) target = $region25
    $region24: #{tpu_custom_call.1} parent=1 // pred_region
      %51 = dma.done [#allocation3], 32
    $region25: #{tpu_custom_call.1} parent=1 // pred_fallthru
      _
    // Predicated region
    $region26: #{tpu_custom_call.1} parent=1 // pred_check
      _
    $region27: #{tpu_custom_call.1} parent=1 // pred_check_branch
      %53 = sbr.rel (0) target = $region29
    $region28: #{tpu_custom_call.1} parent=1 // pred_region
      %54 = dma.done [#allocation6], 64
    $region29: #{tpu_custom_call.1} parent=1 // pred_fallthru
      _
    // Predicated region
    $region30: #{tpu_custom_call.1} parent=1 // pred_check
      _
    $region31: #{tpu_custom_call.1} parent=1 // pred_check_branch
      %56 = sbr.rel (0) target = $region33
    $region32: #{tpu_custom_call.1} parent=1 // pred_region
      %57 = dma.done [#allocation6], 2048
    $region33: #{tpu_custom_call.1} parent=1 // pred_fallthru
      _
    %v59 = vld [vmem:[#allocation2] sm:$0x3]
    %v60 = vpack.c.bf16 %v59, %v59
    %v61 = vld [vmem:[#allocation5] sm:$0xf]
    %v62 = vld [vmem:[%s2] sm:$0x1]
    %v64 = vlaneseq
    %v65 = vshrl.u32 %v64, 7
    %v66 = vsub.s32 0, %v65
    %v67 = vrot.slane %v62, %v66
    %vm69 = vcmask 64512
    %v71 = vsel %vm69, %v60, 0
    %vm73 = vcmask 1043456
    %v75 = vsel %vm73, %v61, 0
    %77 = vmatprep.subr.bf16.mxu0 0
    %78 = vmatpush1.bf16.msra.mxu0 %v75
    %79 = vmatprep.subr.bf16.mxu0 0
    %80 = vmatpush1.bf16.msra.mxu0 0
    %81 = vmatprep.subr.bf16.mxu0 0
    %82 = vmatpush1.bf16.msra.mxu0 0
    %83 = vmatprep.subr.bf16.mxu0 0
    %84 = vmatpush1.bf16.msra.mxu0 0
    %85 = vmatprep.subr.bf16.mxu0 0
    %86 = vmatpush1.bf16.msra.mxu0 0
    %87 = vmatprep.subr.bf16.mxu0 0
    %88 = vmatpush1.bf16.msra.mxu0 0
    %89 = vmatprep.subr.bf16.mxu0 0
    %90 = vmatpush1.bf16.msra.mxu0 0
    %91 = vmatprep.subr.bf16.mxu0 0
    %92 = vmatpush1.bf16.msra.mxu0 0
    %93 = vmatprep.subr.bf16.mxu0 0
    %94 = vmatpush1.bf16.msra.mxu0 0
    %95 = vmatprep.subr.bf16.mxu0 0
    %96 = vmatpush1.bf16.msra.mxu0 0
    %97 = vmatprep.subr.bf16.mxu0 0
    %98 = vmatpush1.bf16.msra.mxu0 0
    %99 = vmatprep.subr.bf16.mxu0 0
    %100 = vmatpush1.bf16.msra.mxu0 0
    %101 = vmatprep.subr.bf16.mxu0 0
    %102 = vmatpush1.bf16.msra.mxu0 0
    %103 = vmatprep.subr.bf16.mxu0 0
    %104 = vmatpush1.bf16.msra.mxu0 0
    %105 = vmatprep.subr.bf16.mxu0 0
    %106 = vmatpush1.bf16.msra.mxu0 0
    %107 = vmatprep.subr.bf16.mxu0 0
    %108 = vmatpush1.bf16.msra.mxu0 0
    %109 = vmatprep.mubr.bf16.mxu0 0
    %110 = vmatmul.mubr.bf16.gmra.mrb[0].mxu0 %v71
    %v111 = vpop.f32.mrb[0].mxu0
    %v112 = vadd.f32 %v67, %v111
    %v113 = vpop.f32.mrb[0].mxu0
    %v114 = vpop.f32.mrb[0].mxu0
    %v115 = vpop.f32.mrb[0].mxu0
    %116 = vdwg.mxu0
    %v117 = vmax.f32 %v112, 0.0
    %v118 = vpack.c.bf16 %v117, %v117
    %v119 = vld [vmem:[#allocation7] sm:$0xff]
    %v120 = vld [vmem:[#allocation7 + $0x8] sm:$0xff]
    %v121 = vld [vmem:[#allocation7 + $0x10] sm:$0xff]
    %v122 = vld [vmem:[#allocation7 + $0x18] sm:$0xff]
    %v123 = vld [vmem:[#allocation7 + $0x20] sm:$0xff]
    %v124 = vld [vmem:[#allocation7 + $0x28] sm:$0xff]
    %v125 = vld [vmem:[#allocation7 + $0x30] sm:$0xff]
    %v126 = vld [vmem:[#allocation7 + $0x38] sm:$0xff]
    %v127 = vld [vmem:[#allocation7 + $0x40] sm:$0xff]
    %v128 = vld [vmem:[#allocation7 + $0x48] sm:$0xff]
    %v129 = vld [vmem:[#allocation7 + $0x50] sm:$0xff]
    %v130 = vld [vmem:[#allocation7 + $0x58] sm:$0xff]
    %v131 = vld [vmem:[#allocation7 + $0x60] sm:$0xff]
    %v132 = vld [vmem:[#allocation7 + $0x68] sm:$0xff]
    %v133 = vld [vmem:[#allocation7 + $0x70] sm:$0xff]
    %v134 = vld [vmem:[#allocation7 + $0x78] sm:$0xff]
    %v135 = vld [vmem:[%s4] sm:$0xff]
    %v137 = vlaneseq
    %v138 = vshrl.u32 %v137, 7
    %v139 = vsub.s32 0, %v138
    %v140 = vrot.slane %v135, %v139
    %v141 = vlaneseq
    %v142 = vshrl.u32 %v141, 7
    %v143 = vsub.s32 1, %v142
    %v144 = vrot.slane %v135, %v143
    %v145 = vlaneseq
    %v146 = vshrl.u32 %v145, 7
    %v147 = vsub.s32 2, %v146
    %v148 = vrot.slane %v135, %v147
    %v149 = vlaneseq
    %v150 = vshrl.u32 %v149, 7
    %v151 = vsub.s32 3, %v150
    %v152 = vrot.slane %v135, %v151
    %v153 = vlaneseq
    %v154 = vshrl.u32 %v153, 7
    %v155 = vsub.s32 4, %v154
    %v156 = vrot.slane %v135, %v155
    %v157 = vlaneseq
    %v158 = vshrl.u32 %v157, 7
    %v159 = vsub.s32 5, %v158
    %v160 = vrot.slane %v135, %v159
    %v161 = vlaneseq
    %v162 = vshrl.u32 %v161, 7
    %v163 = vsub.s32 6, %v162
    %v164 = vrot.slane %v135, %v163
    %v165 = vlaneseq
    %v166 = vshrl.u32 %v165, 7
    %v167 = vsub.s32 7, %v166
    %v168 = vrot.slane %v135, %v167
    %v193 = vunpack.c.l.b16 %v119
    %v194 = vunpack.c.h.b16 %v119
    %v195 = vunpack.c.l.b16 %v120
    %v196 = vunpack.c.h.b16 %v120
    %v197 = vunpack.c.l.b16 %v121
    %v198 = vunpack.c.h.b16 %v121
    %v199 = vunpack.c.l.b16 %v122
    %v200 = vunpack.c.h.b16 %v122
    %v201 = vunpack.c.l.b16 %v123
    %v202 = vunpack.c.h.b16 %v123
    %v203 = vunpack.c.l.b16 %v124
    %v204 = vunpack.c.h.b16 %v124
    %v205 = vunpack.c.l.b16 %v125
    %v206 = vunpack.c.h.b16 %v125
    %v207 = vunpack.c.l.b16 %v126
    %v208 = vunpack.c.h.b16 %v126
    %v209 = vunpack.c.l.b16 %v127
    %v210 = vunpack.c.h.b16 %v127
    %v211 = vunpack.c.l.b16 %v128
    %v212 = vunpack.c.h.b16 %v128
    %v213 = vunpack.c.l.b16 %v129
    %v214 = vunpack.c.h.b16 %v129
    %v215 = vunpack.c.l.b16 %v130
    %v216 = vunpack.c.h.b16 %v130
    %v217 = vunpack.c.l.b16 %v131
    %v218 = vunpack.c.h.b16 %v131
    %v219 = vunpack.c.l.b16 %v132
    %v220 = vunpack.c.h.b16 %v132
    %v221 = vunpack.c.l.b16 %v133
    %v222 = vunpack.c.h.b16 %v133
    %v223 = vunpack.c.l.b16 %v134
    %v224 = vunpack.c.h.b16 %v134
    %v225 = vpack.c.b16 %v201, %v193
    %v226 = vpack.c.b16 %v202, %v194
    %v227 = vpack.c.b16 %v203, %v195
    %v228 = vpack.c.b16 %v204, %v196
    %v229 = vpack.c.b16 %v205, %v197
    %v230 = vpack.c.b16 %v206, %v198
    %v231 = vpack.c.b16 %v207, %v199
    %v232 = vpack.c.b16 %v208, %v200
    %v233 = vpack.c.b16 %v217, %v209
    %v234 = vpack.c.b16 %v218, %v210
    %v235 = vpack.c.b16 %v219, %v211
    %v236 = vpack.c.b16 %v220, %v212
    %v237 = vpack.c.b16 %v221, %v213
    %v238 = vpack.c.b16 %v222, %v214
    %v239 = vpack.c.b16 %v223, %v215
    %v240 = vpack.c.b16 %v224, %v216
    %vm257 = vcmask 261120
    %v259 = vsel %vm257, %v118, 0
    %261 = vmatprep.subr.bf16.mxu0 %v226
    %262 = vmatpush1.bf16.msra.mxu0 %v225
    %263 = vmatprep.subr.bf16.mxu0 %v234
    %264 = vmatpush1.bf16.msra.mxu0 %v233
    %265 = vmatprep.subr.bf16.mxu0 0
    %266 = vmatpush1.bf16.msra.mxu0 0
    %267 = vmatprep.subr.bf16.mxu0 0
    %268 = vmatpush1.bf16.msra.mxu0 0
    %269 = vmatprep.subr.bf16.mxu0 0
    %270 = vmatpush1.bf16.msra.mxu0 0
    %271 = vmatprep.subr.bf16.mxu0 0
    %272 = vmatpush1.bf16.msra.mxu0 0
    %273 = vmatprep.subr.bf16.mxu0 0
    %274 = vmatpush1.bf16.msra.mxu0 0
    %275 = vmatprep.subr.bf16.mxu0 0
    %276 = vmatpush1.bf16.msra.mxu0 0
    %277 = vmatprep.subr.bf16.mxu0 0
    %278 = vmatpush1.bf16.msra.mxu0 0
    %279 = vmatprep.subr.bf16.mxu0 0
    %280 = vmatpush1.bf16.msra.mxu0 0
    %281 = vmatprep.subr.bf16.mxu0 0
    %282 = vmatpush1.bf16.msra.mxu0 0
    %283 = vmatprep.subr.bf16.mxu0 0
    %284 = vmatpush1.bf16.msra.mxu0 0
    %285 = vmatprep.subr.bf16.mxu0 0
    %286 = vmatpush1.bf16.msra.mxu0 0
    %287 = vmatprep.subr.bf16.mxu0 0
    %288 = vmatpush1.bf16.msra.mxu0 0
    %289 = vmatprep.subr.bf16.mxu0 0
    %290 = vmatpush1.bf16.msra.mxu0 0
    %291 = vmatprep.subr.bf16.mxu0 0
    %292 = vmatpush1.bf16.msra.mxu0 0
    %293 = vmatprep.mubr.bf16.mxu0 0
    %294 = vmatmul.mubr.bf16.gmra.mrb[0].mxu0 %v259
    %v295 = vpop.f32.mrb[0].mxu0
    %v296 = vadd.f32 %v140, %v295
    %v297 = vpop.f32.mrb[0].mxu0
    %v298 = vadd.f32 %v144, %v297
    %v299 = vpop.f32.mrb[0].mxu0
    %v300 = vpop.f32.mrb[0].mxu0
    %301 = vdwg.mxu0
    %302 = vmatprep.subr.bf16.mxu0 %v228
    %303 = vmatpush1.bf16.msra.mxu0 %v227
    %304 = vmatprep.subr.bf16.mxu0 %v236
    %305 = vmatpush1.bf16.msra.mxu0 %v235
    %306 = vmatprep.subr.bf16.mxu0 0
    %307 = vmatpush1.bf16.msra.mxu0 0
    %308 = vmatprep.subr.bf16.mxu0 0
    %309 = vmatpush1.bf16.msra.mxu0 0
    %310 = vmatprep.subr.bf16.mxu0 0
    %311 = vmatpush1.bf16.msra.mxu0 0
    %312 = vmatprep.subr.bf16.mxu0 0
    %313 = vmatpush1.bf16.msra.mxu0 0
    %314 = vmatprep.subr.bf16.mxu0 0
    %315 = vmatpush1.bf16.msra.mxu0 0
    %316 = vmatprep.subr.bf16.mxu0 0
    %317 = vmatpush1.bf16.msra.mxu0 0
    %318 = vmatprep.subr.bf16.mxu0 0
    %319 = vmatpush1.bf16.msra.mxu0 0
    %320 = vmatprep.subr.bf16.mxu0 0
    %321 = vmatpush1.bf16.msra.mxu0 0
    %322 = vmatprep.subr.bf16.mxu0 0
    %323 = vmatpush1.bf16.msra.mxu0 0
    %324 = vmatprep.subr.bf16.mxu0 0
    %325 = vmatpush1.bf16.msra.mxu0 0
    %326 = vmatprep.subr.bf16.mxu0 0
    %327 = vmatpush1.bf16.msra.mxu0 0
    %328 = vmatprep.subr.bf16.mxu0 0
    %329 = vmatpush1.bf16.msra.mxu0 0
    %330 = vmatprep.subr.bf16.mxu0 0
    %331 = vmatpush1.bf16.msra.mxu0 0
    %332 = vmatprep.subr.bf16.mxu0 0
    %333 = vmatpush1.bf16.msra.mxu0 0
    %334 = vmatprep.mubr.bf16.mxu0 0
    %335 = vmatmul.mubr.bf16.gmra.mrb[0].mxu0 %v259
    %v336 = vpop.f32.mrb[0].mxu0
    %v337 = vadd.f32 %v148, %v336
    %v338 = vpop.f32.mrb[0].mxu0
    %v339 = vadd.f32 %v152, %v338
    %v340 = vpop.f32.mrb[0].mxu0
    %v341 = vpop.f32.mrb[0].mxu0
    %342 = vdwg.mxu0
    %343 = vmatprep.subr.bf16.mxu0 %v230
    %344 = vmatpush1.bf16.msra.mxu0 %v229
    %345 = vmatprep.subr.bf16.mxu0 %v238
    %346 = vmatpush1.bf16.msra.mxu0 %v237
    %347 = vmatprep.subr.bf16.mxu0 0
    %348 = vmatpush1.bf16.msra.mxu0 0
    %349 = vmatprep.subr.bf16.mxu0 0
    %350 = vmatpush1.bf16.msra.mxu0 0
    %351 = vmatprep.subr.bf16.mxu0 0
    %352 = vmatpush1.bf16.msra.mxu0 0
    %353 = vmatprep.subr.bf16.mxu0 0
    %354 = vmatpush1.bf16.msra.mxu0 0
    %355 = vmatprep.subr.bf16.mxu0 0
    %356 = vmatpush1.bf16.msra.mxu0 0
    %357 = vmatprep.subr.bf16.mxu0 0
    %358 = vmatpush1.bf16.msra.mxu0 0
    %359 = vmatprep.subr.bf16.mxu0 0
    %360 = vmatpush1.bf16.msra.mxu0 0
    %361 = vmatprep.subr.bf16.mxu0 0
    %362 = vmatpush1.bf16.msra.mxu0 0
    %363 = vmatprep.subr.bf16.mxu0 0
    %364 = vmatpush1.bf16.msra.mxu0 0
    %365 = vmatprep.subr.bf16.mxu0 0
    %366 = vmatpush1.bf16.msra.mxu0 0
    %367 = vmatprep.subr.bf16.mxu0 0
    %368 = vmatpush1.bf16.msra.mxu0 0
    %369 = vmatprep.subr.bf16.mxu0 0
    %370 = vmatpush1.bf16.msra.mxu0 0
    %371 = vmatprep.subr.bf16.mxu0 0
    %372 = vmatpush1.bf16.msra.mxu0 0
    %373 = vmatprep.subr.bf16.mxu0 0
    %374 = vmatpush1.bf16.msra.mxu0 0
    %375 = vmatprep.mubr.bf16.mxu0 0
    %376 = vmatmul.mubr.bf16.gmra.mrb[0].mxu0 %v259
    %v377 = vpop.f32.mrb[0].mxu0
    %v378 = vadd.f32 %v156, %v377
    %v379 = vpop.f32.mrb[0].mxu0
    %v380 = vadd.f32 %v160, %v379
    %v381 = vpop.f32.mrb[0].mxu0
    %v382 = vpop.f32.mrb[0].mxu0
    %383 = vdwg.mxu0
    %384 = vmatprep.subr.bf16.mxu0 %v232
    %385 = vmatpush1.bf16.msra.mxu0 %v231
    %386 = vmatprep.subr.bf16.mxu0 %v240
    %387 = vmatpush1.bf16.msra.mxu0 %v239
    %388 = vmatprep.subr.bf16.mxu0 0
    %389 = vmatpush1.bf16.msra.mxu0 0
    %390 = vmatprep.subr.bf16.mxu0 0
    %391 = vmatpush1.bf16.msra.mxu0 0
    %392 = vmatprep.subr.bf16.mxu0 0
    %393 = vmatpush1.bf16.msra.mxu0 0
    %394 = vmatprep.subr.bf16.mxu0 0
    %395 = vmatpush1.bf16.msra.mxu0 0
    %396 = vmatprep.subr.bf16.mxu0 0
    %397 = vmatpush1.bf16.msra.mxu0 0
    %398 = vmatprep.subr.bf16.mxu0 0
    %399 = vmatpush1.bf16.msra.mxu0 0
    %400 = vmatprep.subr.bf16.mxu0 0
    %401 = vmatpush1.bf16.msra.mxu0 0
    %402 = vmatprep.subr.bf16.mxu0 0
    %403 = vmatpush1.bf16.msra.mxu0 0
    %404 = vmatprep.subr.bf16.mxu0 0
    %405 = vmatpush1.bf16.msra.mxu0 0
    %406 = vmatprep.subr.bf16.mxu0 0
    %407 = vmatpush1.bf16.msra.mxu0 0
    %408 = vmatprep.subr.bf16.mxu0 0
    %409 = vmatpush1.bf16.msra.mxu0 0
    %410 = vmatprep.subr.bf16.mxu0 0
    %411 = vmatpush1.bf16.msra.mxu0 0
    %412 = vmatprep.subr.bf16.mxu0 0
    %413 = vmatpush1.bf16.msra.mxu0 0
    %414 = vmatprep.subr.bf16.mxu0 0
    %415 = vmatpush1.bf16.msra.mxu0 0
    %416 = vmatprep.mubr.bf16.mxu0 0
    %417 = vmatmul.mubr.bf16.gmra.mrb[0].mxu0 %v259
    %v418 = vpop.f32.mrb[0].mxu0
    %v419 = vadd.f32 %v164, %v418
    %v420 = vpop.f32.mrb[0].mxu0
    %v421 = vadd.f32 %v168, %v420
    %v422 = vpop.f32.mrb[0].mxu0
    %v423 = vpop.f32.mrb[0].mxu0
    %424 = vdwg.mxu0
    %v433 = vcombine.low %v296, %v298
    %v434 = vcombine.low %v337, %v339
    %v436 = vunpack.c.l.s4 1983009808
    %v437 = vunpack.c.0.s8 %v436
    %v438 = vlaneseq
    %v439 = vshrl.u32 %v438, 7
    %v440 = vsub.s32 %v437, %v439
    %v441 = vrot.slane %v433, %v440
    %v443 = vunpack.c.l.s4 1983009808
    %v444 = vunpack.c.0.s8 %v443
    %v445 = vlaneseq
    %v446 = vshrl.u32 %v445, 7
    %v447 = vsub.s32 %v444, %v446
    %v448 = vrot.slane %v434, %v447
    %v449 = vcombine.low %v441, %v448
    %v450 = vcombine.low %v378, %v380
    %v451 = vcombine.low %v419, %v421
    %v453 = vunpack.c.l.s4 1983009808
    %v454 = vunpack.c.0.s8 %v453
    %v455 = vlaneseq
    %v456 = vshrl.u32 %v455, 7
    %v457 = vsub.s32 %v454, %v456
    %v458 = vrot.slane %v450, %v457
    %v460 = vunpack.c.l.s4 1983009808
    %v461 = vunpack.c.0.s8 %v460
    %v462 = vlaneseq
    %v463 = vshrl.u32 %v462, 7
    %v464 = vsub.s32 %v461, %v463
    %v465 = vrot.slane %v451, %v464
    %v466 = vcombine.low %v458, %v465
    %469 = vst [vmem:[#allocation8] sm:$0xff] %v449
    %470 = vst [vmem:[#allocation8 + $0x8] sm:$0xff] %v466
    // Predicated region
    $region34: #{tpu_custom_call.1} parent=1 // pred_check
      _
    $region35: #{tpu_custom_call.1} parent=1 // pred_check_branch
      %472 = sbr.rel (0) target = $region37
    $region36: #{tpu_custom_call.1} parent=1 // pred_region
      %s474 = ssub.s32 256, 256
      %475 = vsyncadd [#allocation4], %s474
      %s477 = sshll.u32 [#allocation8], 4
      %s478 = int_to_ptr.vmem [resolvable:$true] %s477
      %480 = dma.vmem_to_hbm [thread:$0]  %s478, 256, %s5, [#allocation4]
    $region37: #{tpu_custom_call.1} parent=1 // pred_fallthru
      _
    // Predicated region
    $region38: #{tpu_custom_call.1} parent=1 // pred_check
      _
    $region39: #{tpu_custom_call.1} parent=1 // pred_check_branch
      %482 = sbr.rel (0) target = $region41
    $region40: #{tpu_custom_call.1} parent=1 // pred_region
      %483 = dma.done [#allocation4], 256
    $region41: #{tpu_custom_call.1} parent=1 // pred_fallthru
      _
    %484 = vsyncpa [#allocation3], 1
    %485 = vsyncpa [#allocation6], 1
    %486 = vsyncpa [#allocation4], 1

</llo_original>
